<compile_context>
chip_gen: v7x
topology: tpu7x:2x2x1
jax: 0.10.0
libtpu: 0.0.40
codegen_flags: <defaults>
</compile_context>

<pallas_src>
import functools
import math

import jax
import jax.numpy as jnp
from jax.experimental import pallas as pl
from jax.experimental.pallas import tpu as pltpu


# ---------------------------------------------------------------- kernel ----

def _random_layer_kernel(n_inputs, scale, *refs):
    """One row-tile of RandomLayer: n matmuls + scaled elementwise product.

    refs = (x_0, ..., x_{n-1}, R_0, ..., R_{n-1}, out)
    x_i:  (tm, d_i)        bf16 tile of input i for this grid step
    R_i:  (d_i, output_dim) bf16, VMEM-resident across all grid steps
    out:  (tm, output_dim) f32
    """
    x_refs = refs[:n_inputs]
    r_refs = refs[n_inputs:2 * n_inputs]
    o_ref = refs[2 * n_inputs]

    # P_0 * (1 / output_dim**(1/n))  == torch's  return_list[0] / pow(...)
    acc = jnp.dot(x_refs[0][...], r_refs[0][...],
                  preferred_element_type=jnp.float32) * scale
    # Remaining projections (Python loop unrolls at trace time).
    for i in range(1, n_inputs):
        acc = acc * jnp.dot(x_refs[i][...], r_refs[i][...],
                            preferred_element_type=jnp.float32)
    o_ref[...] = acc.astype(o_ref.dtype)


# --------------------------------------------------------------- wrapper ----

def random_layer(input_list, random_matrices, output_dim, *,
                 compute_dtype=jnp.bfloat16,
                 out_dtype=jnp.float32,
                 max_tile_rows=1024,
                 vmem_budget_bytes=24 * 1024 * 1024):
    n = len(input_list)
    assert n >= 1 and n == len(random_matrices)
    N = input_list[0].shape[0]
    d_list = [int(x.shape[1]) for x in input_list]
    for x, r, d in zip(input_list, random_matrices, d_list):
        assert x.shape == (N, d)
        assert r.shape == (d, output_dim)
    assert output_dim % 128 == 0, "output_dim must be lane-dense (multiple of 128)"
    # TODO(synk): pad output_dim up to a multiple of 128 here if ragged widths appear.

    scale = 1.0 / math.pow(float(output_dim), 1.0 / n)

    # bf16 matmul inputs: MXU-native and halves the dominant HBM byte traffic.
    xs = [x.astype(compute_dtype) for x in input_list]
    rs = [r.astype(compute_dtype) for r in random_matrices]

    in_bytes = jnp.dtype(compute_dtype).itemsize
    o_bytes = jnp.dtype(out_dtype).itemsize

    # --- row-tile sizing against a conservative VMEM budget -----------------
    # R_i blocks are resident (count both pipeline buffers to be safe); x/out
    # tiles are double-buffered per grid step.
    resident = 2 * sum(d * output_dim for d in d_list) * in_bytes
    per_row = 2 * (sum(d_list) * in_bytes + output_dim * o_bytes)
    tm = (vmem_budget_bytes - resident) // per_row
    tm = max(8, min(max_tile_rows, (tm // 8) * 8))           # sublane-aligned
    n_pad = int(pl.cdiv(N, 8)) * 8
    tm = min(tm, n_pad)
    n_pad = int(pl.cdiv(N, tm)) * tm

    if n_pad != N:
        xs = [jnp.pad(x, ((0, n_pad - N), (0, 0))) for x in xs]

    grid = (n_pad // tm,)
    x_specs = [pl.BlockSpec((tm, d), lambda i: (i, 0)) for d in d_list]
    r_specs = [pl.BlockSpec((d, output_dim), lambda i: (0, 0)) for d in d_list]
    out_spec = pl.BlockSpec((tm, output_dim), lambda i: (i, 0))

    # Explicit scoped-VMEM limit with headroom (portable across v5e/v6e/v7x).
    vmem_limit = resident + per_row * tm + (4 << 20)
    vmem_limit = int(min(max(vmem_limit, 16 << 20), 40 << 20))

    kernel = functools.partial(_random_layer_kernel, n, scale)
    out = pl.pallas_call(
        kernel,
        out_shape=jax.ShapeDtypeStruct((n_pad, output_dim), out_dtype),
        grid_spec=pltpu.PrefetchScalarGridSpec(
            num_scalar_prefetch=0,
            grid=grid,
            in_specs=x_specs + r_specs,
            out_specs=out_spec),
        compiler_params=pltpu.CompilerParams(
            dimension_semantics=("parallel",),   # engages both TCs on v7x
            vmem_limit_bytes=vmem_limit),
    )(*xs, *rs)

    return out[:N] if n_pad != N else out


# ------------------------------------------------------ pure-JAX reference --

def reference(input_list, random_matrices, output_dim, compute_dtype=None):
    if compute_dtype is not None:
        input_list = [x.astype(compute_dtype) for x in input_list]
        random_matrices = [r.astype(compute_dtype) for r in random_matrices]
    projs = [jnp.dot(x, r, preferred_element_type=jnp.float32)
             for x, r in zip(input_list, random_matrices)]
    out = projs[0] / math.pow(float(output_dim), 1.0 / len(projs))
    for p in projs[1:]:
        out = out * p
    return out


# ------------------------------------------------------------------- main ----

if __name__ == "__main__":
    key = jax.random.PRNGKey(0)
    k_x0, k_x1, k_r0, k_r1 = jax.random.split(key, 4)

    # Small shapes consistent with the module (CDAN-style: two inputs,
    # e.g. features + class probabilities, projected to a common random space).
    N = 8
    input_dim_list = [32, 16]
    output_dim = 128            # lane-dense output width (multiple of 128)

    x0 = jax.random.normal(k_x0, (N, input_dim_list[0]), jnp.float32)
    x1 = jax.random.normal(k_x1, (N, input_dim_list[1]), jnp.float32)
    r0 = jax.random.normal(k_r0, (input_dim_list[0], output_dim), jnp.float32)
    r1 = jax.random.normal(k_r1, (input_dim_list[1], output_dim), jnp.float32)

    out = random_layer([x0, x1], [r0, r1], output_dim)
    out = jax.block_until_ready(out)
    assert out.shape == (N, output_dim)

    # Tight check against a reference at the same precision (bf16 MXU inputs,
    # f32 accumulation + combine).
    ref_bf16 = reference([x0, x1], [r0, r1], output_dim, compute_dtype=jnp.bfloat16)
    assert jnp.allclose(out, ref_bf16, rtol=1e-4, atol=1e-4), "mismatch vs bf16 reference"

    # Loose sanity check against the pure-f32 reference (bf16 projection tolerance).
    ref_f32 = reference([x0, x1], [r0, r1], output_dim)
    assert jnp.allclose(out, ref_f32, rtol=1e-1, atol=1e-1), "mismatch vs f32 reference"

    # Exercise the multi-step grid + row-padding path (N=20 -> pad to 24, tm=8).
    N2 = 20
    x0b = jax.random.normal(k_x0, (N2, input_dim_list[0]), jnp.float32)
    x1b = jax.random.normal(k_x1, (N2, input_dim_list[1]), jnp.float32)
    out2 = jax.block_until_ready(
        random_layer([x0b, x1b], [r0, r1], output_dim, max_tile_rows=8))
    ref2 = reference([x0b, x1b], [r0, r1], output_dim, compute_dtype=jnp.bfloat16)
    assert out2.shape == (N2, output_dim)
    assert jnp.allclose(out2, ref2, rtol=1e-4, atol=1e-4), "mismatch vs bf16 reference (grid path)"

    print("KERNEL_OK")
</pallas_src>

<mosaic_0001>
module attributes {stable_mosaic.version = 11 : i64} {
  func.func @_random_layer_kernel(%arg0: i32, %arg1: memref<8x32xbf16, #tpu.memory_space<vmem>>, %arg2: memref<8x16xbf16, #tpu.memory_space<vmem>>, %arg3: memref<32x128xbf16, #tpu.memory_space<vmem>>, %arg4: memref<16x128xbf16, #tpu.memory_space<vmem>>, %arg5: memref<8x128xf32, #tpu.memory_space<vmem>>) attributes {dimension_semantics = [#tpu.dimension_semantics<parallel>], iteration_bounds = array<i64: 1>, scalar_prefetch = 0 : i64, scratch_operands = 0 : i64, tpu.core_type = #tpu.core_type<tc>, window_params = [{transform_indices = @transform_0, window_bounds = array<i64: 8, 32>}, {transform_indices = @transform_1, window_bounds = array<i64: 8, 16>}, {pipeline_mode = #tpu.pipeline_mode<synchronous>, transform_indices = @transform_2, window_bounds = array<i64: 32, 128>}, {pipeline_mode = #tpu.pipeline_mode<synchronous>, transform_indices = @transform_3, window_bounds = array<i64: 16, 128>}, {transform_indices = @transform_4, window_bounds = array<i64: 8, 128>}]} {
    %c0 = arith.constant 0 : index
    %c0_0 = arith.constant 0 : index
    %0 = vector.load %arg1[%c0, %c0_0] : memref<8x32xbf16, #tpu.memory_space<vmem>>, vector<8x32xbf16>
    %c0_1 = arith.constant 0 : index
    %c0_2 = arith.constant 0 : index
    %1 = vector.load %arg3[%c0_1, %c0_2] : memref<32x128xbf16, #tpu.memory_space<vmem>>, vector<32x128xbf16>
    %cst = arith.constant dense<0.000000e+00> : vector<8x128xf32>
    %2 = tpu.matmul %0, %1, %cst {dimension_numbers = #tpu.dot_dimension_numbers<[1], [0], [0], [1], [0, 0, 1, 1], [], []>} : vector<8x32xbf16>, vector<32x128xbf16>, vector<8x128xf32> -> vector<8x128xf32>
    %cst_3 = arith.constant 0.0883883461 : f32
    %3 = vector.broadcast %cst_3 : f32 to vector<8x128xf32>
    %4 = arith.mulf %2, %3 : vector<8x128xf32>
    %c0_4 = arith.constant 0 : index
    %c0_5 = arith.constant 0 : index
    %5 = vector.load %arg2[%c0_4, %c0_5] : memref<8x16xbf16, #tpu.memory_space<vmem>>, vector<8x16xbf16>
    %c0_6 = arith.constant 0 : index
    %c0_7 = arith.constant 0 : index
    %6 = vector.load %arg4[%c0_6, %c0_7] : memref<16x128xbf16, #tpu.memory_space<vmem>>, vector<16x128xbf16>
    %cst_8 = arith.constant dense<0.000000e+00> : vector<8x128xf32>
    %7 = tpu.matmul %5, %6, %cst_8 {dimension_numbers = #tpu.dot_dimension_numbers<[1], [0], [0], [1], [0, 0, 1, 1], [], []>} : vector<8x16xbf16>, vector<16x128xbf16>, vector<8x128xf32> -> vector<8x128xf32>
    %8 = arith.mulf %4, %7 : vector<8x128xf32>
    %c0_9 = arith.constant 0 : index
    %c0_10 = arith.constant 0 : index
    %9 = vector.load %arg5[%c0_9, %c0_10] : memref<8x128xf32, #tpu.memory_space<vmem>>, vector<8x128xf32>
    tpu.vector_store %arg5[%c0_9, %c0_10], %8 {strides = array<i32>} : memref<8x128xf32, #tpu.memory_space<vmem>>, vector<8x128xf32>,
    return
  }
  func.func @transform_0(%arg0: i32) -> (i32, i32) {
    %c0_i32 = arith.constant 0 : i32
    %c0_i32_0 = arith.constant 0 : i32
    return %arg0, %c0_i32 : i32, i32
  }
  func.func @transform_1(%arg0: i32) -> (i32, i32) {
    %c0_i32 = arith.constant 0 : i32
    %c0_i32_0 = arith.constant 0 : i32
    return %arg0, %c0_i32 : i32, i32
  }
  func.func @transform_2(%arg0: i32) -> (i32, i32) {
    %c0_i32 = arith.constant 0 : i32
    %c0_i32_0 = arith.constant 0 : i32
    %c0_i32_1 = arith.constant 0 : i32
    return %c0_i32, %c0_i32_0 : i32, i32
  }
  func.func @transform_3(%arg0: i32) -> (i32, i32) {
    %c0_i32 = arith.constant 0 : i32
    %c0_i32_0 = arith.constant 0 : i32
    %c0_i32_1 = arith.constant 0 : i32
    return %c0_i32, %c0_i32_0 : i32, i32
  }
  func.func @transform_4(%arg0: i32) -> (i32, i32) {
    %c0_i32 = arith.constant 0 : i32
    %c0_i32_0 = arith.constant 0 : i32
    return %arg0, %c0_i32 : i32, i32
  }
}

</mosaic_0001>

<llo_original>
// kernel: tpu_custom_call.1
$region0: #{tpu_custom_call.1}
  #allocation0 [shape = 'u32[]', space=smem, size = 0x4, offset = 0x4, fixed_abs, tag = 'smem constant byte address 0x4 - core index']
  #allocation1 [shape = 'u32[144,128]{1,0:T(1,128)}', space=vmem, size = 0x12000, scoped, tag = 'internal scratch']
  %s0 = inlined_call_operand.hbm [shape: bf16[8,32], index: 0, kind: input, shape index: {}]
  %s1 = inlined_call_operand.hbm [shape: bf16[8,16], index: 1, kind: input, shape index: {}]
  %s2 = inlined_call_operand.hbm [shape: bf16[32,128], index: 2, kind: input, shape index: {}]
  %s3 = inlined_call_operand.vmem [shape: bf16[16,128], index: 3, kind: input, shape index: {}]
  %s4 = inlined_call_operand.hbm [shape: f32[8,128], index: 4, kind: output, shape index: {}]
  %s5 = sld [smem:[#allocation0]]
  $region38: #{tpu_custom_call.1} parent=0
    _
  %s7 = ssub.s32 1, %s5
  %s8 = scalar_select 0, %s7, %s5
  $region1: #{tpu_custom_call.1} parent=0
    #allocation2 [shape = 'u8[2048]{0}', space=vmem, size = 0x800, scoped, tag = 'input window, operand 0, single buffered']
    #allocation3 [shape = 's32[1]{0}', space=sflag, size = 0x4, scoped, tag = 'scoped memory for tpu_custom_call.1']
    #allocation4 [shape = 's32[1]{0}', space=sflag, size = 0x4, scoped, tag = 'scoped memory for tpu_custom_call.1']
    #allocation5 [shape = 'u8[2048]{0}', space=vmem, size = 0x800, scoped, tag = 'input window, operand 1, single buffered']
    #allocation6 [shape = 's32[1]{0}', space=sflag, size = 0x4, scoped, tag = 'scoped memory for tpu_custom_call.1']
    #allocation7 [shape = 'u8[8192]{0}', space=vmem, size = 0x2000, scoped, tag = 'input window, operand 2, single buffered']
    #allocation8 [shape = 'u8[4096]{0}', space=vmem, size = 0x1000, scoped, tag = 'output window, operand 0, single buffered']
    %9 = vsyncpa [#allocation3], 0
    %10 = vsyncpa [#allocation6], 0
    %11 = vsyncpa [#allocation4], 0
    // Predicated region
    $region2: #{tpu_custom_call.1} parent=1 // pred_check
      _
    $region3: #{tpu_custom_call.1} parent=1 // pred_check_branch
      %13 = sbr.rel (0) target = $region5
    $region4: #{tpu_custom_call.1} parent=1 // pred_region
      %s15 = ssub.s32 64, 64
      %16 = vsyncadd [#allocation3], %s15
      %s18 = sshll.u32 [#allocation2], 4
      %s19 = int_to_ptr.vmem [resolvable:$true] %s18
      %21 = dma.hbm_to_vmem [thread:$0]  %s0, 64, %s19, [#allocation3]
    $region5: #{tpu_custom_call.1} parent=1 // pred_fallthru
      _
    // Predicated region
    $region6: #{tpu_custom_call.1} parent=1 // pred_check
      _
    $region7: #{tpu_custom_call.1} parent=1 // pred_check_branch
      %23 = sbr.rel (0) target = $region9
    $region8: #{tpu_custom_call.1} parent=1 // pred_region
      %s25 = ssub.s32 64, 64
      %26 = vsyncadd [#allocation6], %s25
      %s28 = sshll.u32 [#allocation5], 4
      %s29 = int_to_ptr.vmem [resolvable:$true] %s28
      %31 = dma.hbm_to_vmem [thread:$0]  %s1, 64, %s29, [#allocation6]
    $region9: #{tpu_custom_call.1} parent=1 // pred_fallthru
      _
    // Predicated region
    $region10: #{tpu_custom_call.1} parent=1 // pred_check
      _
    $region11: #{tpu_custom_call.1} parent=1 // pred_check_branch
      %33 = sbr.rel (0) target = $region13
    $region12: #{tpu_custom_call.1} parent=1 // pred_region
      %s35 = ssub.s32 256, 256
      %36 = vsyncadd [#allocation6], %s35
      %s37 = sshll.u32 [#allocation7], 4
      %s38 = int_to_ptr.vmem [resolvable:$true] %s37
      %43 = dma.hbm_to_vmem [thread:$0]  %s2, 256, %s38, [#allocation6], 64, 64, 4
    $region13: #{tpu_custom_call.1} parent=1 // pred_fallthru
      _
    // Predicated region
    $region14: #{tpu_custom_call.1} parent=1 // pred_check
      _
    $region15: #{tpu_custom_call.1} parent=1 // pred_check_branch
      %45 = sbr.rel (0) target = $region17
    $region16: #{tpu_custom_call.1} parent=1 // pred_region
      _
    $region17: #{tpu_custom_call.1} parent=1 // pred_fallthru
      _
    // Predicated region
    $region18: #{tpu_custom_call.1} parent=1 // pred_check
      _
    $region19: #{tpu_custom_call.1} parent=1 // pred_check_branch
      %47 = sbr.rel (0) target = $region21
    $region20: #{tpu_custom_call.1} parent=1 // pred_region
      %48 = dma.done [#allocation3], 64
    $region21: #{tpu_custom_call.1} parent=1 // pred_fallthru
      _
    // Predicated region
    $region22: #{tpu_custom_call.1} parent=1 // pred_check
      _
    $region23: #{tpu_custom_call.1} parent=1 // pred_check_branch
      %50 = sbr.rel (0) target = $region25
    $region24: #{tpu_custom_call.1} parent=1 // pred_region
      %51 = dma.done [#allocation6], 64
    $region25: #{tpu_custom_call.1} parent=1 // pred_fallthru
      _
    // Predicated region
    $region26: #{tpu_custom_call.1} parent=1 // pred_check
      _
    $region27: #{tpu_custom_call.1} parent=1 // pred_check_branch
      %53 = sbr.rel (0) target = $region29
    $region28: #{tpu_custom_call.1} parent=1 // pred_region
      %54 = dma.done [#allocation6], 256
    $region29: #{tpu_custom_call.1} parent=1 // pred_fallthru
      _
    %v56 = vld [vmem:[#allocation2] sm:$0xf]
    %v57 = vld [vmem:[#allocation7] sm:$0xf]
    %v58 = vld [vmem:[#allocation7 + $0x4] sm:$0xf]
    %v59 = vld [vmem:[#allocation7 + $0x8] sm:$0xf]
    %v60 = vld [vmem:[#allocation7 + $0xc] sm:$0xf]
    %v65 = vunpack.c.l.b16 %v57
    %v66 = vunpack.c.l.b16 %v58
    %v67 = vunpack.c.l.b16 %v59
    %v68 = vunpack.c.l.b16 %v60
    %v69 = vpack.c.b16 %v66, %v65
    %v70 = vpack.c.b16 %v68, %v67
    %vm73 = vcmask 261120
    %v75 = vsel %vm73, %v56, 0
    %77 = vmatprep.subr.bf16.mxu0 0
    %78 = vmatpush1.bf16.msra.mxu0 %v69
    %79 = vmatprep.subr.bf16.mxu0 0
    %80 = vmatpush1.bf16.msra.mxu0 %v70
    %81 = vmatprep.subr.bf16.mxu0 0
    %82 = vmatpush1.bf16.msra.mxu0 0
    %83 = vmatprep.subr.bf16.mxu0 0
    %84 = vmatpush1.bf16.msra.mxu0 0
    %85 = vmatprep.subr.bf16.mxu0 0
    %86 = vmatpush1.bf16.msra.mxu0 0
    %87 = vmatprep.subr.bf16.mxu0 0
    %88 = vmatpush1.bf16.msra.mxu0 0
    %89 = vmatprep.subr.bf16.mxu0 0
    %90 = vmatpush1.bf16.msra.mxu0 0
    %91 = vmatprep.subr.bf16.mxu0 0
    %92 = vmatpush1.bf16.msra.mxu0 0
    %93 = vmatprep.subr.bf16.mxu0 0
    %94 = vmatpush1.bf16.msra.mxu0 0
    %95 = vmatprep.subr.bf16.mxu0 0
    %96 = vmatpush1.bf16.msra.mxu0 0
    %97 = vmatprep.subr.bf16.mxu0 0
    %98 = vmatpush1.bf16.msra.mxu0 0
    %99 = vmatprep.subr.bf16.mxu0 0
    %100 = vmatpush1.bf16.msra.mxu0 0
    %101 = vmatprep.subr.bf16.mxu0 0
    %102 = vmatpush1.bf16.msra.mxu0 0
    %103 = vmatprep.subr.bf16.mxu0 0
    %104 = vmatpush1.bf16.msra.mxu0 0
    %105 = vmatprep.subr.bf16.mxu0 0
    %106 = vmatpush1.bf16.msra.mxu0 0
    %107 = vmatprep.subr.bf16.mxu0 0
    %108 = vmatpush1.bf16.msra.mxu0 0
    %109 = vmatprep.mubr.bf16.mxu0 0
    %110 = vmatmul.mubr.bf16.gmra.mrb[0].mxu0 %v75
    %v111 = vpop.f32.mrb[0].mxu0
    %v112 = vadd.f32 0.0, %v111
    %v113 = vpop.f32.mrb[0].mxu0
    %v114 = vpop.f32.mrb[0].mxu0
    %v115 = vpop.f32.mrb[0].mxu0
    %116 = vdwg.mxu0
    %v117 = vmul.f32 %v112, 0.088388346
    %v118 = vld [vmem:[#allocation5] sm:$0xf]
    %v119 = vld [vmem:[%s3] sm:$0xf]
    %v120 = vld [vmem:[%s3 + $0x4] sm:$0xf]
    %v123 = vunpack.c.l.b16 %v119
    %v124 = vunpack.c.l.b16 %v120
    %v125 = vpack.c.b16 %v124, %v123
    %vm127 = vcmask 130048
    %v129 = vsel %vm127, %v118, 0
    %131 = vmatprep.subr.bf16.mxu0 0
    %132 = vmatpush1.bf16.msra.mxu0 %v125
    %133 = vmatprep.subr.bf16.mxu0 0
    %134 = vmatpush1.bf16.msra.mxu0 0
    %135 = vmatprep.subr.bf16.mxu0 0
    %136 = vmatpush1.bf16.msra.mxu0 0
    %137 = vmatprep.subr.bf16.mxu0 0
    %138 = vmatpush1.bf16.msra.mxu0 0
    %139 = vmatprep.subr.bf16.mxu0 0
    %140 = vmatpush1.bf16.msra.mxu0 0
    %141 = vmatprep.subr.bf16.mxu0 0
    %142 = vmatpush1.bf16.msra.mxu0 0
    %143 = vmatprep.subr.bf16.mxu0 0
    %144 = vmatpush1.bf16.msra.mxu0 0
    %145 = vmatprep.subr.bf16.mxu0 0
    %146 = vmatpush1.bf16.msra.mxu0 0
    %147 = vmatprep.subr.bf16.mxu0 0
    %148 = vmatpush1.bf16.msra.mxu0 0
    %149 = vmatprep.subr.bf16.mxu0 0
    %150 = vmatpush1.bf16.msra.mxu0 0
    %151 = vmatprep.subr.bf16.mxu0 0
    %152 = vmatpush1.bf16.msra.mxu0 0
    %153 = vmatprep.subr.bf16.mxu0 0
    %154 = vmatpush1.bf16.msra.mxu0 0
    %155 = vmatprep.subr.bf16.mxu0 0
    %156 = vmatpush1.bf16.msra.mxu0 0
    %157 = vmatprep.subr.bf16.mxu0 0
    %158 = vmatpush1.bf16.msra.mxu0 0
    %159 = vmatprep.subr.bf16.mxu0 0
    %160 = vmatpush1.bf16.msra.mxu0 0
    %161 = vmatprep.subr.bf16.mxu0 0
    %162 = vmatpush1.bf16.msra.mxu0 0
    %163 = vmatprep.mubr.bf16.mxu0 0
    %164 = vmatmul.mubr.bf16.gmra.mrb[0].mxu0 %v129
    %v165 = vpop.f32.mrb[0].mxu0
    %v166 = vadd.f32 0.0, %v165
    %v167 = vpop.f32.mrb[0].mxu0
    %v168 = vpop.f32.mrb[0].mxu0
    %v169 = vpop.f32.mrb[0].mxu0
    %170 = vdwg.mxu0
    %v171 = vmul.f32 %v117, %v166
    %172 = vst [vmem:[#allocation8] sm:$0xff] %v171
    // Predicated region
    $region30: #{tpu_custom_call.1} parent=1 // pred_check
      _
    $region31: #{tpu_custom_call.1} parent=1 // pred_check_branch
      %174 = sbr.rel (0) target = $region33
    $region32: #{tpu_custom_call.1} parent=1 // pred_region
      %s176 = ssub.s32 128, 128
      %177 = vsyncadd [#allocation4], %s176
      %s179 = sshll.u32 [#allocation8], 4
      %s180 = int_to_ptr.vmem [resolvable:$true] %s179
      %182 = dma.vmem_to_hbm [thread:$0]  %s180, 128, %s4, [#allocation4]
    $region33: #{tpu_custom_call.1} parent=1 // pred_fallthru
      _
    // Predicated region
    $region34: #{tpu_custom_call.1} parent=1 // pred_check
      _
    $region35: #{tpu_custom_call.1} parent=1 // pred_check_branch
      %184 = sbr.rel (0) target = $region37
    $region36: #{tpu_custom_call.1} parent=1 // pred_region
      %185 = dma.done [#allocation4], 128
    $region37: #{tpu_custom_call.1} parent=1 // pred_fallthru
      _
    %186 = vsyncpa [#allocation3], 1
    %187 = vsyncpa [#allocation6], 1
    %188 = vsyncpa [#allocation4], 1

</llo_original>
